<compile_context>
chip_gen: v6e
topology: v6e:2x2x1
jax: 0.10.0
libtpu: 0.0.40
codegen_flags: <defaults>
</compile_context>

<pallas_src>
import functools

import jax
import jax.numpy as jnp
from jax.experimental import pallas as pl
from jax.experimental.pallas import tpu as pltpu


# --------------------------------------------------------------------------- #
# Kernel
# --------------------------------------------------------------------------- #
def _focal_loss_kernel(x_ref, t_ref, out_ref, *, alpha, gamma, n_valid, block_n,
                       compute_dtype, reduce_in_kernel, mask_rows):
    x = x_ref[...]                                   # (bn, C) logits
    t = t_ref[...]                                   # (bn, 1) int32 targets

    # Wide (bn, C) passes in compute_dtype (bf16 on v6e/v7x for bf16 inputs,
    # f32 otherwise); narrow (bn, 1) tail math always in f32.
    xw = x.astype(compute_dtype)
    m = jnp.max(xw, axis=-1, keepdims=True)                          # (bn, 1)
    ex = jnp.exp(xw - m)                                             # (bn, C)
    sumex = jnp.sum(ex, axis=-1, keepdims=True, dtype=jnp.float32)   # f32 accum
    lse = m.astype(jnp.float32) + jnp.log(sumex)                     # (bn, 1)

    # Target logit via a where-gather over the class (lane) axis; the sum is
    # exact (C-1 zeros + the selected logit), so cast to f32 afterwards.
    cls = jax.lax.broadcasted_iota(jnp.int32, xw.shape, 1)           # (bn, C)
    xt = jnp.sum(jnp.where(cls == t, xw, 0.0), axis=-1,
                 keepdims=True).astype(jnp.float32)                  # (bn, 1)

    ce = lse - xt                               # -log softmax[target] per row
    pt = jnp.exp(xt - lse)                      # softmax prob of target class
    d = jnp.maximum(1.0 - pt, 0.0)              # clamp: pt can round a ulp above 1

    g = float(gamma)
    if g == 0.0:
        mod = jnp.ones_like(d)
    elif g.is_integer() and 0.0 < g <= 8.0:
        # integer power -> VPU multiplies only; no log/exp, no NaN at d == 0
        mod = d
        for _ in range(int(g) - 1):
            mod = mod * d
    else:
        # TODO(synk): negative non-integer gamma yields inf at d == 0.
        mod = jnp.power(d, g)

    loss = (alpha * mod) * ce                   # (bn, 1) f32

    if mask_rows:
        # Ragged N without a wrapper pad: the boundary block's tail rows hold
        # unspecified garbage (possibly NaN/Inf).  A *select* (not a multiply)
        # zeroes them so the block partial sum stays correct.
        row = (pl.program_id(0) * block_n
               + jax.lax.broadcasted_iota(jnp.int32, loss.shape, 0))
        loss = jnp.where(row < n_valid, loss, 0.0)

    if reduce_in_kernel:
        # Lane-dense (8, 128) slab per block: one unmasked vst instead of
        # ~bn/8 masked vst.msk for a lane-sparse (bn, 1) writeback.
        partial = jnp.sum(loss)
        sub = jax.lax.broadcasted_iota(jnp.int32, (8, 128), 0)
        lane = jax.lax.broadcasted_iota(jnp.int32, (8, 128), 1)
        out_ref[...] = jnp.where((sub == 0) & (lane == 0), partial, 0.0)
    else:
        # reduction='none': per-row losses; Pallas clips the boundary block
        # writeback to the valid rows, so no masking is needed here.
        out_ref[...] = loss


# --------------------------------------------------------------------------- #
# Sizing helpers (generation-aware)
# --------------------------------------------------------------------------- #
def _round_up(x, m):
    return ((x + m - 1) // m) * m


def _device_kind():
    try:
        return jax.devices()[0].device_kind.lower()
    except Exception:
        return ""


def _vmem_capacity_bytes(kind):
    try:
        return int(pltpu.get_tpu_info().vmem_capacity_bytes)
    except Exception:
        pass
    if "v7" in kind:
        return 64 << 20
    if kind:
        return 128 << 20
    return 64 << 20          # unknown: be conservative


def _choose_block_n(n, c, dtype, tile_budget_bytes):
    """Largest row tile that fits the tile budget, using lane/sublane-padded sizes."""
    itemsize = jnp.dtype(dtype).itemsize
    mult = max(8, 32 // itemsize)        # sublane packing: 8 for f32, 16 for bf16
    c_pad = _round_up(c, 128)            # lane padding: real VMEM footprint
    # per row: double-buffered input tile + ~3 f32-wide temporaries (shift/exp/select)
    bytes_per_row = c_pad * (2 * itemsize + 12) + 256
    bn = tile_budget_bytes // max(bytes_per_row, 1)
    bn = max(mult, min(int(bn), 2048))
    # Keep >= ~4 grid steps so ("parallel",) can shard across v7x's two
    # TensorCores and the pipeline prologue/epilogue amortizes.
    quarter = _round_up(max(pl.cdiv(n, 4), 1), mult)
    bn = min(bn, quarter)
    bn = max(mult, (bn // mult) * mult)
    return bn


# --------------------------------------------------------------------------- #
# Wrapper
# --------------------------------------------------------------------------- #
def focal_loss(inputs, targets, alpha=0.9, gamma=2.0, reduction="mean", block_n=None):
    """Focal loss for (N, C) logits and (N,) integer targets (multi-class branch)."""
    # TODO(synk): the 1-D (sigmoid + BCE-with-logits) branch of FocalLoss.forward
    # is not implemented here; only the multi-class branch.
    # TODO(synk): for vocab-scale C that doesn't fit VMEM, add a second grid
    # axis over C with an online (flash-softmax style) max/sum carry.
    # TODO(synk): for tiny C (<= ~32) only C of 128 lanes carry data; a
    # wrapper-side repack (multiple rows per lane group) could recover ~8x.
    N, C = inputs.shape

    kind = _device_kind()
    is_v5e = ("v5e" in kind) or ("v5 lite" in kind) or ("v5litepod" in kind)
    vmem_cap = _vmem_capacity_bytes(kind)
    if vmem_cap <= (64 << 20):           # v7x-class part (64 MiB VMEM per TC)
        vmem_limit = 40 << 20
        tile_budget = 14 << 20
    else:                                # v5e / v6e (128 MiB VMEM)
        vmem_limit = 96 << 20
        tile_budget = 36 << 20

    if block_n is None:
        block_n = _choose_block_n(N, C, inputs.dtype, tile_budget)
    grid_n = pl.cdiv(N, block_n)

    t2 = targets.astype(jnp.int32).reshape(N, 1)

    # bf16 wide-pass compute on v6e/v7x (bf16 VPU/EUP); f32 everywhere on v5e.
    compute_dtype = jnp.float32
    if inputs.dtype == jnp.bfloat16 and not is_v5e:
        compute_dtype = jnp.bfloat16

    reduce_in_kernel = reduction in ("mean", "sum")

    logits_spec = (
        pl.BlockSpec((block_n, C), lambda i: (i, 0), pipeline_mode=pl.Buffered(3))
        if is_v5e else
        pl.BlockSpec((block_n, C), lambda i: (i, 0))
    )
    in_specs = [logits_spec, pl.BlockSpec((block_n, 1), lambda i: (i, 0))]

    if reduce_in_kernel:
        out_shape = jax.ShapeDtypeStruct((grid_n * 8, 128), jnp.float32)
        out_specs = pl.BlockSpec((8, 128), lambda i: (i, 0))
    else:
        out_shape = jax.ShapeDtypeStruct((N, 1), jnp.float32)
        out_specs = pl.BlockSpec((block_n, 1), lambda i: (i, 0))

    kernel = functools.partial(
        _focal_loss_kernel,
        alpha=float(alpha),
        gamma=float(gamma),
        n_valid=N,
        block_n=block_n,
        compute_dtype=compute_dtype,
        reduce_in_kernel=reduce_in_kernel,
        mask_rows=reduce_in_kernel and (N % block_n != 0),
    )

    out = pl.pallas_call(
        kernel,
        out_shape=out_shape,
        grid_spec=pltpu.PrefetchScalarGridSpec(
            num_scalar_prefetch=0,
            grid=(grid_n,),
            in_specs=in_specs,
            out_specs=out_specs,
        ),
        compiler_params=pltpu.CompilerParams(
            dimension_semantics=("parallel",),   # rows are independent
            vmem_limit_bytes=vmem_limit,
        ),
    )(inputs, t2)

    if reduction == "mean":
        return jnp.sum(out) / jnp.float32(N)
    elif reduction == "sum":
        return jnp.sum(out)
    else:
        return out[:, 0]


# --------------------------------------------------------------------------- #
# Pure-JAX reference & tests
# --------------------------------------------------------------------------- #
def _reference_focal_loss(inputs, targets, alpha=0.9, gamma=2.0, reduction="mean"):
    x = inputs.astype(jnp.float32)
    logp = jax.nn.log_softmax(x, axis=1)
    ce = -jnp.take_along_axis(logp, targets[:, None].astype(jnp.int32), axis=1)[:, 0]
    pt = jnp.exp(-ce)
    loss = alpha * (1.0 - pt) ** gamma * ce
    if reduction == "mean":
        return jnp.mean(loss)
    if reduction == "sum":
        return jnp.sum(loss)
    return loss


if __name__ == "__main__":
    key = jax.random.PRNGKey(0)
    k1, k2, k3, k4, k5, k6 = jax.random.split(key, 6)

    # multi-class problem: 32 samples, 16 classes
    N, C = 32, 16
    inputs = jax.random.normal(k1, (N, C), dtype=jnp.float32)
    targets = jax.random.randint(k2, (N,), 0, C, dtype=jnp.int32)

    out = jax.block_until_ready(focal_loss(inputs, targets, alpha=0.9, gamma=2.0))
    ref = _reference_focal_loss(inputs, targets, alpha=0.9, gamma=2.0)
    assert jnp.allclose(out, ref, rtol=1e-5, atol=1e-6), (out, ref)

    out_sum = jax.block_until_ready(focal_loss(inputs, targets, reduction="sum"))
    ref_sum = _reference_focal_loss(inputs, targets, reduction="sum")
    assert jnp.allclose(out_sum, ref_sum, rtol=1e-5, atol=1e-5), (out_sum, ref_sum)

    out_none = jax.block_until_ready(focal_loss(inputs, targets, reduction="none"))
    ref_none = _reference_focal_loss(inputs, targets, reduction="none")
    assert jnp.allclose(out_none, ref_none, rtol=1e-5, atol=1e-6), (out_none, ref_none)

    # ragged N (exercises the no-pad boundary block + in-kernel mask path)
    N2 = 37
    inputs2 = jax.random.normal(k3, (N2, C), dtype=jnp.float32)
    targets2 = jax.random.randint(k4, (N2,), 0, C, dtype=jnp.int32)
    out2 = jax.block_until_ready(focal_loss(inputs2, targets2, alpha=0.9, gamma=2.0))
    ref2 = _reference_focal_loss(inputs2, targets2, alpha=0.9, gamma=2.0)
    assert jnp.allclose(out2, ref2, rtol=1e-5, atol=1e-6), (out2, ref2)

    # bf16 logits (bf16 wide-pass compute on v6e/v7x, f32 on v5e)
    inputs3 = jax.random.normal(k5, (N, C)).astype(jnp.bfloat16)
    targets3 = jax.random.randint(k6, (N,), 0, C, dtype=jnp.int32)
    out3 = jax.block_until_ready(focal_loss(inputs3, targets3, alpha=0.9, gamma=2.0))
    ref3 = _reference_focal_loss(inputs3, targets3, alpha=0.9, gamma=2.0)
    assert jnp.allclose(out3, ref3, rtol=5e-2, atol=5e-3), (out3, ref3)

    print("KERNEL_OK")
</pallas_src>

<mosaic_0001>
module attributes {stable_mosaic.version = 11 : i64} {
  func.func @_focal_loss_kernel(%arg0: i32, %arg1: memref<8x16xf32, #tpu.memory_space<vmem>>, %arg2: memref<8x1xi32, #tpu.memory_space<vmem>>, %arg3: memref<8x128xf32, #tpu.memory_space<vmem>>) attributes {dimension_semantics = [#tpu.dimension_semantics<parallel>], iteration_bounds = array<i64: 4>, scalar_prefetch = 0 : i64, scratch_operands = 0 : i64, tpu.core_type = #tpu.core_type<tc>, window_params = [{transform_indices = @transform_0, window_bounds = array<i64: 8, 16>}, {transform_indices = @transform_1, window_bounds = array<i64: 8, 1>}, {transform_indices = @transform_2, window_bounds = array<i64: 8, 128>}]} {
    %c0 = arith.constant 0 : index
    %c0_0 = arith.constant 0 : index
    %0 = vector.load %arg1[%c0, %c0_0] : memref<8x16xf32, #tpu.memory_space<vmem>>, vector<8x16xf32>
    %c0_1 = arith.constant 0 : index
    %c0_2 = arith.constant 0 : index
    %1 = vector.load %arg2[%c0_1, %c0_2] : memref<8x1xi32, #tpu.memory_space<vmem>>, vector<8x1xi32>
    %cst = arith.constant dense<0xFF800000> : vector<8xf32>
    %2 = vector.multi_reduction <maximumf>, %0, %cst [1] : vector<8x16xf32> to vector<8xf32>
    %3 = vector.shape_cast %2 : vector<8xf32> to vector<8x1xf32>
    %4 = vector.broadcast %3 : vector<8x1xf32> to vector<8x16xf32>
    %5 = arith.subf %0, %4 : vector<8x16xf32>
    %6 = math.exp %5 : vector<8x16xf32>
    %cst_3 = arith.constant dense<0.000000e+00> : vector<8xf32>
    %7 = vector.multi_reduction <add>, %6, %cst_3 [1] : vector<8x16xf32> to vector<8xf32>
    %8 = vector.shape_cast %7 : vector<8xf32> to vector<8x1xf32>
    %9 = math.log %8 : vector<8x1xf32>
    %10 = arith.addf %3, %9 : vector<8x1xf32>
    %11 = tpu.iota {dimensions = array<i32: 1>} : vector<8x16xi32>
    %12 = vector.broadcast %1 : vector<8x1xi32> to vector<8x16xi32>
    %13 = arith.cmpi eq, %11, %12 : vector<8x16xi32>
    %cst_4 = arith.constant 0.000000e+00 : f32
    %14 = vector.broadcast %cst_4 : f32 to vector<8x16xf32>
    %15 = arith.select %13, %0, %14 : vector<8x16xi1>, vector<8x16xf32>
    %cst_5 = arith.constant dense<0.000000e+00> : vector<8xf32>
    %16 = vector.multi_reduction <add>, %15, %cst_5 [1] : vector<8x16xf32> to vector<8xf32>
    %17 = vector.shape_cast %16 : vector<8xf32> to vector<8x1xf32>
    %18 = arith.subf %10, %17 : vector<8x1xf32>
    %19 = arith.subf %17, %10 : vector<8x1xf32>
    %20 = math.exp %19 : vector<8x1xf32>
    %cst_6 = arith.constant 1.000000e+00 : f32
    %21 = vector.broadcast %cst_6 : f32 to vector<8x1xf32>
    %22 = arith.subf %21, %20 : vector<8x1xf32>
    %cst_7 = arith.constant 0.000000e+00 : f32
    %23 = vector.broadcast %cst_7 : f32 to vector<8x1xf32>
    %24 = arith.maximumf %22, %23 : vector<8x1xf32>
    %25 = arith.mulf %24, %24 : vector<8x1xf32>
    %cst_8 = arith.constant 0.899999976 : f32
    %26 = vector.broadcast %cst_8 : f32 to vector<8x1xf32>
    %27 = arith.mulf %26, %25 : vector<8x1xf32>
    %28 = arith.mulf %27, %18 : vector<8x1xf32>
    %29 = vector.shape_cast %28 : vector<8x1xf32> to vector<1x8x1xf32>
    %cst_9 = arith.constant dense<0.000000e+00> : vector<1xf32>
    %30 = vector.multi_reduction <add>, %29, %cst_9 [1, 2] : vector<1x8x1xf32> to vector<1xf32>
    %31 = vector.shape_cast %30 : vector<1xf32> to vector<1x1x1xf32>
    %32 = vector.extract %31[0, 0, 0] : f32 from vector<1x1x1xf32>
    %33 = tpu.iota {dimensions = array<i32: 0>} : vector<8x128xi32>
    %34 = tpu.iota {dimensions = array<i32: 1>} : vector<8x128xi32>
    %c0_i32 = arith.constant 0 : i32
    %35 = vector.broadcast %c0_i32 : i32 to vector<8x128xi32>
    %36 = arith.cmpi eq, %33, %35 : vector<8x128xi32>
    %c0_i32_10 = arith.constant 0 : i32
    %37 = vector.broadcast %c0_i32_10 : i32 to vector<8x128xi32>
    %38 = arith.cmpi eq, %34, %37 : vector<8x128xi32>
    %39 = arith.andi %36, %38 : vector<8x128xi1>
    %cst_11 = arith.constant 0.000000e+00 : f32
    %40 = vector.broadcast %32 : f32 to vector<8x128xf32>
    %41 = vector.broadcast %cst_11 : f32 to vector<8x128xf32>
    %42 = arith.select %39, %40, %41 : vector<8x128xi1>, vector<8x128xf32>
    %c0_12 = arith.constant 0 : index
    %c0_13 = arith.constant 0 : index
    %43 = vector.load %arg3[%c0_12, %c0_13] : memref<8x128xf32, #tpu.memory_space<vmem>>, vector<8x128xf32>
    tpu.vector_store %arg3[%c0_12, %c0_13], %42 {strides = array<i32>} : memref<8x128xf32, #tpu.memory_space<vmem>>, vector<8x128xf32>,
    return
  }
  func.func @transform_0(%arg0: i32) -> (i32, i32) {
    %c0_i32 = arith.constant 0 : i32
    %c0_i32_0 = arith.constant 0 : i32
    return %arg0, %c0_i32 : i32, i32
  }
  func.func @transform_1(%arg0: i32) -> (i32, i32) {
    %c0_i32 = arith.constant 0 : i32
    %c0_i32_0 = arith.constant 0 : i32
    return %arg0, %c0_i32 : i32, i32
  }
  func.func @transform_2(%arg0: i32) -> (i32, i32) {
    %c0_i32 = arith.constant 0 : i32
    %c0_i32_0 = arith.constant 0 : i32
    return %arg0, %c0_i32 : i32, i32
  }
}

</mosaic_0001>

<llo_original>
// kernel: tpu_custom_call.1
$region0: #{tpu_custom_call.1}
  #allocation0 [shape = 'u32[]', space=smem, size = 0x4, offset = 0x4, fixed_abs, tag = 'smem constant byte address 0x4 - core index']
  #allocation1 [shape = 'u32[144,128]{1,0:T(1,128)}', space=vmem, size = 0x12000, scoped, tag = 'internal scratch']
  %s0 = inlined_call_operand.vmem [shape: f32[32,16], index: 0, kind: input, shape index: {}]
  %s1 = inlined_call_operand.vmem [shape: s32[32,1], index: 1, kind: input, shape index: {}]
  %s2 = inlined_call_operand.hbm [shape: f32[32,128], index: 2, kind: output, shape index: {}]
  %s3 = sld [smem:[#allocation0]]
  $region41: #{tpu_custom_call.1} parent=0
    _
  %s5 = ssub.s32 1, %s3
  %s6 = scalar_select 0, %s5, %s3
  $region1: #{tpu_custom_call.1} parent=0
    #allocation2 [shape = 'u8[8192]{0}', space=vmem, size = 0x2000, scoped, tag = 'output window, operand 0']
    #allocation3 [shape = 's32[2]{0}', space=sflag, size = 0x8, scoped, tag = 'scoped memory for tpu_custom_call.1']
    %7 = vsyncpa [#allocation3], 0
    %s8 = scalar_lea.sflag [#allocation3], 1
    %9 = vsyncpa %s8, 0
    loop: start=0, step=1, limit=6
    $region2: #{tpu_custom_call.1} parent=1 // loop_pre_header
      _
    $region3: #{tpu_custom_call.1} parent=1 // loop_header
      %s11 = sphi 0, %s15
      %p12 = scmp.ge.s32.totalorder %s11, 6
      %s21 = sphi 0, %s23
      %s24 = sphi 0, %s21
      %s25 = sphi 0, %s24
      %s41 = sphi 0, %s25
      %s47 = sphi 0, %s49
      %s50 = sphi 0, %s47
      %s51 = sphi 0, %s50
      %s67 = sphi 0, %s51
      %s73 = sphi 0, %s75
      %s76 = sphi 0, %s73
      %s77 = sphi 0, %s76
      %s93 = sphi 0, %s77
    $region4: #{tpu_custom_call.1} parent=1 // loop_header_branch
      %14 = sbr.rel (%p12) target = $region8
    $region5: #{tpu_custom_call.1} parent=1 // loop_body
      %s16 = ssub.s32 %s11, 1
      %s17 = ssub.s32 %s11, 2
      %s18 = sadd.s32 %s11, 1
      %s19 = ssub.s32 %s11, %s18
      %p20 = scmp.eq.s32.totalorder %s19, 0
      %s22 = sadd.s32 %s21, 1
      %s23 = scalar_select %p20, %s21, %s22
      %p26 = pneg %p20
      %p27 = scmp.eq.s32.totalorder %s11, 3
      %p28 = por %p26, %p27
      %p29 = scmp.ne.s32.totalorder %s21, %s24
      %p30 = scmp.eq.s32.totalorder %s11, 0
      %p31 = por %p29, %p30
      %p32 = scmp.ne.s32.totalorder %s21, %s24
      %p33 = scmp.eq.s32.totalorder %s16, 3
      %p34 = por %p32, %p33
      %p35 = scmp.ne.s32.totalorder %s24, %s25
      %p36 = scmp.eq.s32.totalorder %s16, 0
      %p37 = por %p35, %p36
      %p38 = scmp.ne.s32.totalorder %s24, %s25
      %p39 = scmp.eq.s32.totalorder %s17, 3
      %p40 = por %p38, %p39
      %p42 = scmp.ne.s32.totalorder %s25, %s41
      %p43 = scmp.eq.s32.totalorder %s17, 0
      %p44 = por %p42, %p43
      %s45 = ssub.s32 %s11, %s18
      %p46 = scmp.eq.s32.totalorder %s45, 0
      %s48 = sadd.s32 %s47, 1
      %s49 = scalar_select %p46, %s47, %s48
      %p52 = pneg %p46
      %p53 = scmp.eq.s32.totalorder %s11, 3
      %p54 = por %p52, %p53
      %p55 = scmp.ne.s32.totalorder %s47, %s50
      %p56 = scmp.eq.s32.totalorder %s11, 0
      %p57 = por %p55, %p56
      %p58 = scmp.ne.s32.totalorder %s47, %s50
      %p59 = scmp.eq.s32.totalorder %s16, 3
      %p60 = por %p58, %p59
      %p61 = scmp.ne.s32.totalorder %s50, %s51
      %p62 = scmp.eq.s32.totalorder %s16, 0
      %p63 = por %p61, %p62
      %p64 = scmp.ne.s32.totalorder %s50, %s51
      %p65 = scmp.eq.s32.totalorder %s17, 3
      %p66 = por %p64, %p65
      %p68 = scmp.ne.s32.totalorder %s51, %s67
      %p69 = scmp.eq.s32.totalorder %s17, 0
      %p70 = por %p68, %p69
      %s71 = ssub.s32 %s11, %s18
      %p72 = scmp.eq.s32.totalorder %s71, 0
      %s74 = sadd.s32 %s73, 1
      %s75 = scalar_select %p72, %s73, %s74
      %p78 = pneg %p72
      %p79 = scmp.eq.s32.totalorder %s11, 3
      %p80 = por %p78, %p79
      %p81 = scmp.ne.s32.totalorder %s73, %s76
      %p82 = scmp.eq.s32.totalorder %s11, 0
      %p83 = por %p81, %p82
      %p84 = scmp.ne.s32.totalorder %s73, %s76
      %p85 = scmp.eq.s32.totalorder %s16, 3
      %p86 = por %p84, %p85
      %p87 = scmp.ne.s32.totalorder %s76, %s77
      %p88 = scmp.eq.s32.totalorder %s16, 0
      %p89 = por %p87, %p88
      %p90 = scmp.ne.s32.totalorder %s76, %s77
      %p91 = scmp.eq.s32.totalorder %s17, 3
      %p92 = por %p90, %p91
      %p94 = scmp.ne.s32.totalorder %s77, %s93
      %p95 = scmp.eq.s32.totalorder %s17, 0
      %p96 = por %p94, %p95
      %p97 = scmp.le.s32.totalorder 1, %s11
      %p98 = scmp.lt.s32.totalorder %s11, 5
      %p99 = pnand %p97, %p98
      %p100 = pneg %p99
      // Predicated region
      $region9: #{tpu_custom_call.1} parent=5 // pred_check
        _
      $region10: #{tpu_custom_call.1} parent=5 // pred_check_branch
        %102 = sbr.rel (%p99) target = $region12
      $region11: #{tpu_custom_call.1} parent=5 // pred_region
        %s103 = ssub.s32 %s11, 1
      $region12: #{tpu_custom_call.1} parent=5 // pred_fallthru
        _
      %p104 = scmp.lt.s32.totalorder %s11, 4
      // Predicated region
      $region13: #{tpu_custom_call.1} parent=5 // pred_check
        %p105 = pneg %p104
      $region14: #{tpu_custom_call.1} parent=5 // pred_check_branch
        %107 = sbr.rel (%p105) target = $region16
      $region15: #{tpu_custom_call.1} parent=5 // pred_region
        // Predicated region
        $region17: #{tpu_custom_call.1} parent=15 // pred_check
          %p108 = pneg %p31
        $region18: #{tpu_custom_call.1} parent=15 // pred_check_branch
          %110 = sbr.rel (%p108) target = $region20
        $region19: #{tpu_custom_call.1} parent=15 // pred_region
          %p111 = scmp.lt.s32.totalorder %s11, 3
          %s112 = scalar_select %p111, %s11, 3
          %s113 = smul.addr %s112, 8
          %s114 = scalar_lea.vmem %s0, %s113
        $region20: #{tpu_custom_call.1} parent=15 // pred_fallthru
          _
        // Predicated region
        $region21: #{tpu_custom_call.1} parent=15 // pred_check
          %p115 = pneg %p57
        $region22: #{tpu_custom_call.1} parent=15 // pred_check_branch
          %117 = sbr.rel (%p115) target = $region24
        $region23: #{tpu_custom_call.1} parent=15 // pred_region
          %p118 = scmp.lt.s32.totalorder %s11, 3
          %s119 = scalar_select %p118, %s11, 3
          %s120 = smul.addr %s119, 8
          %s121 = scalar_lea.vmem %s1, %s120
        $region24: #{tpu_custom_call.1} parent=15 // pred_fallthru
          _
      $region16: #{tpu_custom_call.1} parent=5 // pred_fallthru
        _
      %p122 = scmp.le.s32.totalorder 1, %s11
      %p123 = scmp.lt.s32.totalorder %s11, 5
      %p124 = pnand %p122, %p123
      %p125 = pneg %p124
      // Predicated region
      $region25: #{tpu_custom_call.1} parent=5 // pred_check
        _
      $region26: #{tpu_custom_call.1} parent=5 // pred_check_branch
        %127 = sbr.rel (%p124) target = $region28
      $region27: #{tpu_custom_call.1} parent=5 // pred_region
        %s128 = ssub.s32 %s11, 1
        %p129 = scmp.lt.s32.totalorder %s16, 3
        %s130 = scalar_select %p129, %s16, 3
        %s131 = smul.addr %s130, 8
        %s132 = scalar_lea.vmem %s0, %s131
        %p133 = pneg %p37
        %p134 = pneg %p34
        %p135 = scmp.lt.s32.totalorder %s16, 3
        %s136 = scalar_select %p135, %s16, 3
        %s137 = smul.addr %s136, 8
        %s138 = scalar_lea.vmem %s1, %s137
        %p139 = pneg %p63
        %p140 = pneg %p60
        %p141 = pneg %p89
        %p142 = pneg %p86
        %s143 = sand.u32 %s76, 1
        %s144 = scalar_lea.sflag [#allocation3], %s143
        %s145 = sand.u32 %s76, 1
        %s146 = smul.addr %s145, 8
        %s147 = scalar_lea.vmem [#allocation2], %s146
        %p148 = scmp.lt.s32.totalorder %s16, 3
        %s149 = scalar_select %p148, %s16, 3
        %s150 = smul.addr %s149, 8
        %s151 = scalar_lea.vmem %s0, %s150
        %p152 = scmp.lt.s32.totalorder %s16, 3
        %s153 = scalar_select %p152, %s16, 3
        %s154 = smul.addr %s153, 8
        %s155 = scalar_lea.vmem %s1, %s154
        %v156 = vld [vmem:[%s151] sm:$0xff]
        %v157 = vld [vmem:[%s155] sm:$0xff]
        %vm158 = vcmask 130048
        %v159 = vsel %vm158, %v156, -inf
        %160 = vmax.xlane.f32.xlu0 %v159
        %v161 = vpop.xlane.xlu0 %160
        %v162 = vsub.f32 %v156, %v161
        %v163 = vmul.f32 %v162, 1.442695
        %v164 = vpow.pop %v163
        %v165 = vsel %vm158, %v164, 0.0
        %166 = vadd.xlane.f32.xlu0 %v165
        %v167 = vpop.xlane.xlu0 %166
        %v168 = vlog2.pop %v167
        %v169 = vmul.f32 %v168, 0.6931472
        %v170 = vadd.f32 %v161, %v169
        %v171 = vlaneseq
        %v172 = vand.u32 %v171, 127
        %173 = vset.pattern.permute.xlu0 0
        %174 = vperm.xlu0 %173, %v157
        %v175 = vpop.permute.xlu0 %174
        %vm176 = vcmp.eq.s32.totalorder %v172, %v175
        %v177 = vsel %vm176, %v156, 0.0
        %v178 = vsel %vm158, %v177, 0.0
        %179 = vadd.xlane.f32.xlu0 %v178
        %v180 = vpop.xlane.xlu0 %179
        %v181 = vsub.f32 %v170, %v180
        %v182 = vsub.f32 %v180, %v170
        %v183 = vmul.f32 %v182, 1.442695
        %v184 = vpow.pop %v183
        %v185 = vsub.f32 1.0, %v184
        %v186 = vmax.f32 %v185, 0.0
        %v187 = vmul.f32 %v186, %v186
        %v188 = vmul.f32 %v187, 0.9
        %v189 = vmul.f32 %v188, %v181
        %vm190 = vcmask 7168
        %v191 = vsel %vm190, %v189, 0.0
        %192 = vadd.xlane.f32.xlu0 %v191
        %v193 = vpop.xlane.xlu0 %192
        %v194 = vrot.slane %v193, 4
        %v195 = vadd.f32 %v193, %v194
        %v196 = vrot.slane %v195, 2
        %v197 = vadd.f32 %v195, %v196
        %v198 = vrot.slane %v197, 1
        %v199 = vadd.f32 %v197, %v198
        %s200 = vtos %v199
        %v201 = vlaneseq
        %v202 = vshrl.u32 %v201, 7
        %vm203 = vcmp.eq.s32.totalorder %v202, 0
        %vm204 = vcmp.eq.s32.totalorder %v172, 0
        %vm205 = vmand %vm203, %vm204
        %v206 = vstv %s200
        %v207 = vsel %vm205, %v206, 0.0
        %208 = vst [vmem:[%s147] sm:$0xff] %v207
        %s209 = sand.u32 %s76, 1
        %s210 = scalar_lea.sflag [#allocation3], %s209
        %s211 = sand.u32 %s76, 1
        %s212 = smul.addr %s211, 8
        %s213 = scalar_lea.vmem [#allocation2], %s212
        // Predicated region
        $region29: #{tpu_custom_call.1} parent=27 // pred_check
          %p214 = pneg %p86
        $region30: #{tpu_custom_call.1} parent=27 // pred_check_branch
          %216 = sbr.rel (%p214) target = $region32
        $region31: #{tpu_custom_call.1} parent=27 // pred_region
          %s218 = ssub.s32 128, 128
          %219 = vsyncadd %s210, %s218
          %s220 = smul.addr %s16, 128
          %s221 = scalar_lea.hbm %s2, %s220
          %s223 = sshll.u32 %s213, 4
          %s224 = int_to_ptr.vmem [resolvable:$true] %s223
          %226 = dma.vmem_to_hbm [thread:$0]  %s224, 128, %s221, %s210
        $region32: #{tpu_custom_call.1} parent=27 // pred_fallthru
          _
      $region28: #{tpu_custom_call.1} parent=5 // pred_fallthru
        _
      %p227 = scmp.le.s32.totalorder 2, %s11
      // Predicated region
      $region33: #{tpu_custom_call.1} parent=5 // pred_check
        %p228 = pneg %p227
      $region34: #{tpu_custom_call.1} parent=5 // pred_check_branch
        %230 = sbr.rel (%p228) target = $region36
      $region35: #{tpu_custom_call.1} parent=5 // pred_region
        %s231 = ssub.s32 %s11, 2
        // Predicated region
        $region37: #{tpu_custom_call.1} parent=35 // pred_check
          %p232 = pneg %p92
        $region38: #{tpu_custom_call.1} parent=35 // pred_check_branch
          %234 = sbr.rel (%p232) target = $region40
        $region39: #{tpu_custom_call.1} parent=35 // pred_region
          %s235 = sand.u32 %s77, 1
          %s236 = scalar_lea.sflag [#allocation3], %s235
          %s237 = sand.u32 %s77, 1
          %s238 = smul.addr %s237, 8
          %s239 = scalar_lea.vmem [#allocation2], %s238
          %240 = dma.done %s236, 128
        $region40: #{tpu_custom_call.1} parent=35 // pred_fallthru
          _
      $region36: #{tpu_custom_call.1} parent=5 // pred_fallthru
        _
    $region6: #{tpu_custom_call.1} parent=1 // loop_footer
      %s15 = sadd.s32 1, %s11
    $region7: #{tpu_custom_call.1} parent=1 // loop_footer_branch
      %10 = sbr.rel target = $region3
    $region8: #{tpu_custom_call.1} parent=1 // loop_exit
      _
    %241 = vsyncpa [#allocation3], 1
    %s242 = scalar_lea.sflag [#allocation3], 1
    %243 = vsyncpa %s242, 1

</llo_original>
